<compile_context>
chip_gen: v7x
topology: tpu7x:2x2x1
jax: 0.10.0
libtpu: 0.0.40
codegen_flags: <defaults>
</compile_context>

<pallas_src>
import jax
import jax.numpy as jnp
from jax.experimental import pallas as pl
from jax.experimental.pallas import tpu as pltpu


_LANE_CANDIDATES = (1024, 512, 256, 128)   # widest exactly-dividing lane width wins
_SMALL_INPUT_BYTES = 4 << 20               # below ~4 MiB, fused XLA multiply always wins


def _chip_profile():
    """Best-effort TPU generation detection; conservative defaults if it fails."""
    kind = ""
    try:
        kind = jax.devices()[0].device_kind.lower()
    except Exception:
        pass
    if "7" in kind:
        # v7x: 64 MiB VMEM per TC, 2 TensorCores/chip, bf16 VALU, ~3.2 TB/s HBM.
        return {"block_bytes": 6 << 20, "vmem_limit": 40 << 20,
                "multi_core": True, "native_lowp": True}
    if "v5" in kind:
        # v5e/v5p: 128 MiB VMEM, 1 TC, no bf16 VALU -> keep f32 multiply path.
        return {"block_bytes": 8 << 20, "vmem_limit": 48 << 20,
                "multi_core": False, "native_lowp": False}
    # v6e (and unknown): 128 MiB VMEM, 1 TC, bf16 VALU.
    return {"block_bytes": 8 << 20, "vmem_limit": 48 << 20,
            "multi_core": False, "native_lowp": True}


def _largest_mult8_divisor(n, cap):
    """Largest divisor of n that is a multiple of 8 and <= cap, or None."""
    best = None
    i = 1
    while i * i <= n:
        if n % i == 0:
            for d in (i, n // i):
                if d % 8 == 0 and d <= cap and (best is None or d > best):
                    best = d
        i += 1
    return best


def _mul_kernel_f32(omega_ref, x_ref, o_ref):
    # omega_ref: SMEM (1,1) f32 scalar; x_ref / o_ref: VMEM tiles.
    # Multiply in f32 (matches the f32 PyTorch parameter), cast to output dtype.
    o_ref[...] = (omega_ref[0, 0] * x_ref[...].astype(jnp.float32)).astype(o_ref.dtype)


def _mul_kernel_native(omega_ref, x_ref, o_ref):
    # Native-dtype multiply (bf16 VALU on v6e/v7x): no widen/narrow casts,
    # half the vreg footprint of the f32 path. Rounding may differ by ~1 ulp
    # from the f32-multiply reference.
    o_ref[...] = x_ref[...] * omega_ref[0, 0].astype(x_ref.dtype)


def _xla_fallback(x: jax.Array, omega_0: jax.Array) -> jax.Array:
    # Same semantics as the f32 kernel path: multiply in f32, cast back.
    w = jnp.asarray(omega_0, jnp.float32).reshape(-1)[0]
    return (w * x.astype(jnp.float32)).astype(x.dtype)


def multiply_learned(x: jax.Array, omega_0: jax.Array, *,
                     force_pallas: bool = False,
                     donate_x: bool = False,
                     block_bytes: int | None = None) -> jax.Array:
    """out = omega_0 * x  (omega_0 is a learned scalar parameter, shape (1,) or ()).

    donate_x=True aliases x's buffer to the output (use only when x is donated
    at the jit boundary).  block_bytes overrides the per-generation block size
    (mainly for testing the multi-step / ragged-tail paths with small inputs).
    """
    total = x.size
    itemsize = jnp.dtype(x.dtype).itemsize

    # Small or lane-unfriendly inputs: a fused XLA scalar multiply is strictly
    # better than a standalone kernel (it avoids the mandatory 2N-byte pass).
    if total == 0 or total % 128 != 0 or (not force_pallas and total * itemsize < _SMALL_INPUT_BYTES):
        return _xla_fallback(x, omega_0)

    prof = _chip_profile()
    blk = prof["block_bytes"] if block_bytes is None else block_bytes

    # Lane-dense 2D slab with the widest lane width that divides exactly.
    lane = next(l for l in _LANE_CANDIDATES if total % l == 0)
    rows = total // lane

    target_rows = max(8, blk // (lane * itemsize))
    if prof["multi_core"] and rows >= 16:
        # Keep >= 2 grid steps so CORE_PARALLEL can shard across both v7x TCs.
        target_rows = min(target_rows, max(8, rows // 2))

    if rows <= target_rows:
        tile_rows = rows            # single full-extent block (always a legal tile)
    else:
        div = _largest_mult8_divisor(rows, target_rows)
        if div is not None and div * 2 >= target_rows:
            tile_rows = div         # grid divides evenly: no masked ragged tail
        else:
            # No good divisor: rounded tile; trailing partial block is masked by Pallas.
            tile_rows = max(8, (target_rows // 8) * 8)

    x2d = x.reshape(rows, lane)                                # contiguous reshape: no HBM copy
    omega_smem = jnp.asarray(omega_0, jnp.float32).reshape(1, 1)

    grid_steps = pl.cdiv(rows, tile_rows)
    if prof["multi_core"] and grid_steps >= 2:
        dim_sem = (pltpu.CORE_PARALLEL,)    # actually shards steps across v7x's 2 TCs
    else:
        dim_sem = ("arbitrary",)            # parallel vs arbitrary: measured no-op on 1-TC chips

    use_native = prof["native_lowp"] and x.dtype != jnp.float32
    kernel = _mul_kernel_native if use_native else _mul_kernel_f32

    out2d = pl.pallas_call(
        kernel,
        out_shape=jax.ShapeDtypeStruct((rows, lane), x.dtype),
        grid_spec=pltpu.PrefetchScalarGridSpec(
            num_scalar_prefetch=0,
            grid=(grid_steps,),
            in_specs=[
                pl.BlockSpec(memory_space=pltpu.SMEM),              # omega_0 scalar
                pl.BlockSpec((tile_rows, lane), lambda i: (i, 0)),  # x tile
            ],
            out_specs=pl.BlockSpec((tile_rows, lane), lambda i: (i, 0)),
        ),
        compiler_params=pltpu.CompilerParams(
            dimension_semantics=dim_sem,
            vmem_limit_bytes=prof["vmem_limit"],
        ),
        cost_estimate=pl.CostEstimate(
            flops=total, transcendentals=0, bytes_accessed=2 * total * itemsize),
        input_output_aliases=({1: 0} if donate_x else {}),
    )(omega_smem, x2d)

    return out2d.reshape(x.shape)


if __name__ == "__main__":
    key = jax.random.PRNGKey(0)
    k1, k2, k3, k4 = jax.random.split(key, 4)

    # Deterministic "parameter" init, matching __init__: omega_0.fill_(omega_0_value)
    omega_0_value = 30.0
    omega_0 = jnp.full((1,), omega_0_value, dtype=jnp.float32)

    # 1) Small NCHW input (typical MultiplyLearned usage inside conv nets).
    #    force_pallas=True so the kernel path is exercised despite the small size.
    x = jax.random.normal(k1, (2, 4, 16, 16), dtype=jnp.float32)
    out = jax.block_until_ready(multiply_learned(x, omega_0, force_pallas=True))
    ref = omega_0[0] * x
    assert out.shape == x.shape and out.dtype == x.dtype
    assert jnp.allclose(out, ref, atol=1e-6, rtol=1e-6), "mismatch (single block)"

    # 2) Multi-grid-step path with an evenly dividing tile (no ragged tail):
    #    rows=64, small block override -> tile_rows=16 -> 4 equal grid steps.
    x2 = jax.random.normal(k2, (2, 8, 32, 128), dtype=jnp.float32)
    out2 = jax.block_until_ready(
        multiply_learned(x2, omega_0, force_pallas=True, block_bytes=64 * 1024))
    assert jnp.allclose(out2, omega_0[0] * x2, atol=1e-6, rtol=1e-6), "mismatch (even multi-block)"

    # 3) Ragged trailing block path (rows=36 has no multiple-of-8 divisor):
    #    tile_rows=8 -> masked tail block of 4 rows.
    x3 = jax.random.normal(k3, (3, 3, 32, 128), dtype=jnp.float32)
    out3 = jax.block_until_ready(
        multiply_learned(x3, omega_0, force_pallas=True, block_bytes=32 * 1024))
    assert jnp.allclose(out3, omega_0[0] * x3, atol=1e-6, rtol=1e-6), "mismatch (masked tail)"

    # 4) bf16 input: native-dtype multiply on v6e/v7x, f32 multiply+cast on v5e.
    x4 = jax.random.normal(k4, (2, 4, 16, 128), dtype=jnp.float32).astype(jnp.bfloat16)
    out4 = jax.block_until_ready(multiply_learned(x4, omega_0, force_pallas=True))
    ref4 = omega_0[0] * x4.astype(jnp.float32)
    assert out4.dtype == jnp.bfloat16
    assert jnp.allclose(out4.astype(jnp.float32), ref4, rtol=2e-2, atol=1e-2), "mismatch (bf16)"

    # 5) Small-input XLA fallback path (preferred in practice: fusion is free).
    out5 = jax.block_until_ready(multiply_learned(x, omega_0))
    assert jnp.allclose(out5, ref, atol=1e-6, rtol=1e-6), "mismatch (fallback)"

    print("KERNEL_OK")
</pallas_src>

<mosaic_0001>
module attributes {stable_mosaic.version = 11 : i64} {
  func.func @_mul_kernel_f32(%arg0: i32, %arg1: memref<1x1xf32, #tpu.memory_space<smem>>, %arg2: memref<2x1024xf32, #tpu.memory_space<vmem>>, %arg3: memref<2x1024xf32, #tpu.memory_space<vmem>>) attributes {dimension_semantics = [#tpu.dimension_semantics<arbitrary>], iteration_bounds = array<i64: 1>, scalar_prefetch = 0 : i64, scratch_operands = 0 : i64, tpu.core_type = #tpu.core_type<tc>, window_params = [{transform_indices = @transform_0, window_bounds = array<i64: 1, 1>}, {transform_indices = @transform_1, window_bounds = array<i64: 2, 1024>}, {transform_indices = @transform_2, window_bounds = array<i64: 2, 1024>}]} {
    %c0 = arith.constant 0 : index
    %c0_0 = arith.constant 0 : index
    %0 = memref.load %arg1[%c0, %c0_0] : memref<1x1xf32, #tpu.memory_space<smem>>
    %c0_1 = arith.constant 0 : index
    %c0_2 = arith.constant 0 : index
    %1 = vector.load %arg2[%c0_1, %c0_2] : memref<2x1024xf32, #tpu.memory_space<vmem>>, vector<2x1024xf32>
    %2 = vector.broadcast %0 : f32 to vector<2x1024xf32>
    %3 = arith.mulf %2, %1 : vector<2x1024xf32>
    %c0_3 = arith.constant 0 : index
    %c0_4 = arith.constant 0 : index
    %4 = vector.load %arg3[%c0_3, %c0_4] : memref<2x1024xf32, #tpu.memory_space<vmem>>, vector<2x1024xf32>
    tpu.vector_store %arg3[%c0_3, %c0_4], %3 {strides = array<i32>} : memref<2x1024xf32, #tpu.memory_space<vmem>>, vector<2x1024xf32>,
    return
  }
  func.func @transform_0(%arg0: i32) -> (i32, i32) {
    %c0_i32 = arith.constant 0 : i32
    %c0_i32_0 = arith.constant 0 : i32
    %c0_i32_1 = arith.constant 0 : i32
    return %c0_i32, %c0_i32_0 : i32, i32
  }
  func.func @transform_1(%arg0: i32) -> (i32, i32) {
    %c0_i32 = arith.constant 0 : i32
    %c0_i32_0 = arith.constant 0 : i32
    return %arg0, %c0_i32 : i32, i32
  }
  func.func @transform_2(%arg0: i32) -> (i32, i32) {
    %c0_i32 = arith.constant 0 : i32
    %c0_i32_0 = arith.constant 0 : i32
    return %arg0, %c0_i32 : i32, i32
  }
}

</mosaic_0001>

<llo_original>
// kernel: tpu_custom_call.1
$region0: #{tpu_custom_call.1}
  #allocation0 [shape = 'u32[]', space=smem, size = 0x4, offset = 0x4, fixed_abs, tag = 'smem constant byte address 0x4 - core index']
  #allocation1 [shape = 'u32[144,128]{1,0:T(1,128)}', space=vmem, size = 0x12000, scoped, tag = 'internal scratch']
  #allocation2 [shape = 'f32[1,1]{1,0:T(1,128)S(6)}', space=smem, size = 0x200, scoped, tag = 'scoped memory for tpu_custom_call.1']
  %s0 = inlined_call_operand.<no memory space> [shape: f32[1,1], index: 0, kind: input, shape index: {}]
  %s1 = inlined_call_operand.hbm [shape: f32[2,1024], index: 1, kind: input, shape index: {}]
  %s2 = inlined_call_operand.hbm [shape: f32[2,1024], index: 2, kind: output, shape index: {}]
  %s3 = sld [smem:[#allocation0]]
  $region22: #{tpu_custom_call.1} parent=0
    _
  %s5 = ssub.s32 1, %s3
  %s6 = scalar_select 0, %s5, %s3
  %7 = sst [smem:[#allocation2]] %s0
  $region1: #{tpu_custom_call.1} parent=0
    #allocation3 [shape = 'u8[8192]{0}', space=vmem, size = 0x2000, scoped, tag = 'input window, operand 1, single buffered']
    #allocation4 [shape = 's32[1]{0}', space=sflag, size = 0x4, scoped, tag = 'scoped memory for tpu_custom_call.1']
    #allocation5 [shape = 's32[1]{0}', space=sflag, size = 0x4, scoped, tag = 'scoped memory for tpu_custom_call.1']
    #allocation6 [shape = 'u8[8192]{0}', space=vmem, size = 0x2000, scoped, tag = 'output window, operand 0, single buffered']
    %8 = vsyncpa [#allocation4], 0
    %9 = vsyncpa [#allocation5], 0
    // Predicated region
    $region2: #{tpu_custom_call.1} parent=1 // pred_check
      _
    $region3: #{tpu_custom_call.1} parent=1 // pred_check_branch
      %11 = sbr.rel (0) target = $region5
    $region4: #{tpu_custom_call.1} parent=1 // pred_region
      _
    $region5: #{tpu_custom_call.1} parent=1 // pred_fallthru
      _
    // Predicated region
    $region6: #{tpu_custom_call.1} parent=1 // pred_check
      _
    $region7: #{tpu_custom_call.1} parent=1 // pred_check_branch
      %13 = sbr.rel (0) target = $region9
    $region8: #{tpu_custom_call.1} parent=1 // pred_region
      %s15 = ssub.s32 256, 256
      %16 = vsyncadd [#allocation4], %s15
      %s18 = sshll.u32 [#allocation3], 4
      %s19 = int_to_ptr.vmem [resolvable:$true] %s18
      %21 = dma.hbm_to_vmem [thread:$0]  %s1, 256, %s19, [#allocation4]
    $region9: #{tpu_custom_call.1} parent=1 // pred_fallthru
      _
    // Predicated region
    $region10: #{tpu_custom_call.1} parent=1 // pred_check
      _
    $region11: #{tpu_custom_call.1} parent=1 // pred_check_branch
      %23 = sbr.rel (0) target = $region13
    $region12: #{tpu_custom_call.1} parent=1 // pred_region
      %24 = dma.done [#allocation4], 256
    $region13: #{tpu_custom_call.1} parent=1 // pred_fallthru
      _
    %s25 = sld [smem:[#allocation2]]
    %v26 = vld [vmem:[#allocation3] sm:$0xff]
    %v27 = vld [vmem:[#allocation3 + $0x8] sm:$0xff]
    %v28 = vstv %s25
    %v29 = vmul.f32 %v28, %v26
    %v30 = vmul.f32 %v28, %v27
    %31 = vst [vmem:[#allocation6] sm:$0xff] %v29
    %32 = vst [vmem:[#allocation6 + $0x8] sm:$0xff] %v30
    // Predicated region
    $region14: #{tpu_custom_call.1} parent=1 // pred_check
      _
    $region15: #{tpu_custom_call.1} parent=1 // pred_check_branch
      %34 = sbr.rel (0) target = $region17
    $region16: #{tpu_custom_call.1} parent=1 // pred_region
      %s36 = ssub.s32 256, 256
      %37 = vsyncadd [#allocation5], %s36
      %s39 = sshll.u32 [#allocation6], 4
      %s40 = int_to_ptr.vmem [resolvable:$true] %s39
      %42 = dma.vmem_to_hbm [thread:$0]  %s40, 256, %s2, [#allocation5]
    $region17: #{tpu_custom_call.1} parent=1 // pred_fallthru
      _
    // Predicated region
    $region18: #{tpu_custom_call.1} parent=1 // pred_check
      _
    $region19: #{tpu_custom_call.1} parent=1 // pred_check_branch
      %44 = sbr.rel (0) target = $region21
    $region20: #{tpu_custom_call.1} parent=1 // pred_region
      %45 = dma.done [#allocation5], 256
    $region21: #{tpu_custom_call.1} parent=1 // pred_fallthru
      _
    %46 = vsyncpa [#allocation4], 1
    %47 = vsyncpa [#allocation5], 1

</llo_original>
